<compile_context>
chip_gen: v7x
topology: tpu7x:2x2x1
jax: 0.10.0
libtpu: 0.0.40
codegen_flags: <defaults>
</compile_context>

<pallas_src>
import jax
import jax.numpy as jnp
from jax.experimental import pallas as pl
from jax.experimental.pallas import tpu as pltpu


C1, C2, C3, C4 = 256, 128, 64, 2      # Decoder channel sizes
PATCH = 4 * 4 * 4 * C4                # 128 packed output values per input pixel


def _round_up(x, m):
    return (x + m - 1) // m * m


def _choose_tile_px(hw, batch):
    """Pixel-tile (lane) size and padded pixel count."""
    if hw < 128 or hw % 128 != 0:
        if hw <= 2048:
            return hw, hw                       # full-extent block, no padding
        hw_pad = _round_up(hw, 128)
    else:
        hw_pad = hw
    cap = 2048                                  # amortize ~0.35us/grid-step overhead
    if batch == 1 and hw_pad >= 256:
        cap = min(cap, hw_pad // 2)             # >=2 grid steps for v7x megacore
    tile = max(128, (min(cap, hw_pad) // 128) * 128)
    while hw_pad % tile != 0:                   # avoid padding blow-up
        tile -= 128
    return tile, hw_pad


# ----------------------------------------------------------------------------
# Kernel: one (128,256) @ (256,tile_px) matmul per grid step
# ----------------------------------------------------------------------------
def _decoder_kernel(x_ref, wt_ref, b_ref, o_ref):
    """x_ref : (256, tile_px) f32  input pixels, native NCHW layout
                                   (channels on sublanes, pixels on lanes)
       wt_ref: (128, 256) bf16     collapsed decoder weight (resident in VMEM)
       b_ref : (128, 1)   f32      collapsed bias
       o_ref : (128, tile_px) f32  packed 8x8x2 patch per input pixel
    """
    x = x_ref[...].astype(jnp.bfloat16)          # cast in-kernel (no wrapper pass)
    y = jnp.dot(wt_ref[...], x, preferred_element_type=jnp.float32)
    o_ref[...] = (y + b_ref[...]).astype(o_ref.dtype)


def _decoder_call(x3, wt, bt, *, tile_px, hw_pad):
    B = x3.shape[0]
    grid = (B, hw_pad // tile_px)
    return pl.pallas_call(
        _decoder_kernel,
        out_shape=jax.ShapeDtypeStruct((B, PATCH, hw_pad), jnp.float32),
        grid=grid,
        in_specs=[
            pl.BlockSpec((None, C1, tile_px), lambda b, p: (b, 0, p)),
            # constant index_maps: fetched once, stay resident in VMEM
            pl.BlockSpec((PATCH, C1), lambda b, p: (0, 0)),
            pl.BlockSpec((PATCH, 1), lambda b, p: (0, 0)),
        ],
        out_specs=pl.BlockSpec((None, PATCH, tile_px), lambda b, p: (b, 0, p)),
        compiler_params=pltpu.CompilerParams(
            dimension_semantics=("parallel", "parallel")),
    )(x3, wt, bt)


# ----------------------------------------------------------------------------
# One-time weight packing: collapse the 3 linear ConvTranspose layers
# ----------------------------------------------------------------------------
def pack_decoder_params(params, dtype=jnp.bfloat16):
    """Compose W_total / b_total in f32, cast once.

    Packed output index: out = co*64 + r*8 + c,
      r = 4*d1i + 2*d2i + d3i   (output row offset within the 8x8 patch)
      c = 4*d1j + 2*d2j + d3j   (output col offset within the 8x8 patch)
    """
    (w1, b1), (w2, b2), (w3, b3) = params
    w1 = w1.astype(jnp.float32); w2 = w2.astype(jnp.float32)
    w3 = w3.astype(jnp.float32)
    b1 = b1.astype(jnp.float32); b2 = b2.astype(jnp.float32)
    b3 = b3.astype(jnp.float32)

    # W_total[ci, co, d1i, d1j, d2i, d2j, d3i, d3j]
    wtot = jnp.einsum('ampq,mjrs,jktu->akpqrstu', w1, w2, w3)
    # -> (ci, co, d1i, d2i, d3i, d1j, d2j, d3j) -> (256, 128)
    wtot = jnp.transpose(wtot, (0, 1, 2, 4, 6, 3, 5, 7)).reshape(C1, PATCH)
    wT = jnp.transpose(wtot).astype(dtype)                      # (128, 256)

    # b_total[co, d2i, d2j, d3i, d3j] pieces
    b1_23 = jnp.einsum('i,ijrs,jktu->krstu', b1, w2, w3)        # (co,d2i,d2j,d3i,d3j)
    b2_3 = jnp.einsum('j,jktu->ktu', b2, w3)                    # (co,d3i,d3j)
    btot = (b1_23[:, None, None, :, :, :, :]
            + b2_3[:, None, None, None, None, :, :]
            + b3[:, None, None, None, None, None, None])
    btot = jnp.broadcast_to(btot, (C4, 2, 2, 2, 2, 2, 2))
    # (co, d1i, d1j, d2i, d2j, d3i, d3j) -> (co, d1i, d2i, d3i, d1j, d2j, d3j)
    btot = jnp.transpose(btot, (0, 1, 3, 5, 2, 4, 6)).reshape(PATCH, 1)
    return wT, btot.astype(jnp.float32)


# ----------------------------------------------------------------------------
# Forward pass
# ----------------------------------------------------------------------------
def decoder_forward_packed(x_nchw, packed):
    """x: (B, 256, H, W) float32 -> (B, 2, 8H, 8W) float32."""
    wT, bt = packed
    B, Cin, H, W = x_nchw.shape
    assert Cin == C1
    hw = H * W
    tile_px, hw_pad = _choose_tile_px(hw, B)

    x3 = x_nchw.reshape(B, C1, hw)              # free view, native layout
    if hw_pad != hw:
        x3 = jnp.pad(x3, ((0, 0), (0, 0), (0, hw_pad - hw)))

    y = _decoder_call(x3, wT, bt, tile_px=tile_px, hw_pad=hw_pad)
    y = y[:, :, :hw]

    # Only remaining layout op: scatter each pixel's packed (co, r, c) patch
    # into NCHW: out[b, co, 8h+r, 8w+c] = y[b, co*64+r*8+c, h*W+w].
    y = y.reshape(B, C4, 8, 8, H, W)            # (b, co, r, c, h, w)
    y = jnp.transpose(y, (0, 1, 4, 2, 5, 3))    # (b, co, h, r, w, c)
    return y.reshape(B, C4, 8 * H, 8 * W)


decoder_forward = jax.jit(decoder_forward_packed)


# ----------------------------------------------------------------------------
# Parameter init (matches nn.ConvTranspose2d defaults) + pure-JAX reference
# ----------------------------------------------------------------------------
def init_decoder_params(key):
    specs = [(C1, C2), (C2, C3), (C3, C4)]
    params = []
    for i, (cin, cout) in enumerate(specs):
        kw_key, kb_key = jax.random.split(jax.random.fold_in(key, i))
        bound = 1.0 / jnp.sqrt(jnp.float32(cout * 2 * 2))
        w = jax.random.uniform(kw_key, (cin, cout, 2, 2), jnp.float32,
                               minval=-bound, maxval=bound)
        b = jax.random.uniform(kb_key, (cout,), jnp.float32,
                               minval=-bound, maxval=bound)
        params.append((w, b))
    return params


def ref_upconv2x2(x, w, b):
    # out[b, co, 2h+di, 2w+dj] = sum_ci x[b,ci,h,w] * w[ci,co,di,dj] + b[co]
    y = jnp.einsum('bihw,iopq->bohpwq', x, w)
    B, Co, H, _, W, _ = y.shape
    return y.reshape(B, Co, 2 * H, 2 * W) + b[None, :, None, None]


def ref_forward(x, params):
    for (w, b) in params:
        x = ref_upconv2x2(x, w, b)
    return x


if __name__ == "__main__":
    key = jax.random.PRNGKey(0)
    params = init_decoder_params(key)
    packed = pack_decoder_params(params)

    # Small input consistent with the module: NCHW with 256 input channels.
    x = jax.random.normal(jax.random.fold_in(key, 99), (2, 256, 4, 4),
                          dtype=jnp.float32)

    out = jax.block_until_ready(decoder_forward(x, packed))
    assert out.shape == (2, 2, 32, 32), out.shape

    ref = jax.block_until_ready(ref_forward(x, params))
    err = float(jnp.max(jnp.abs(out - ref)))
    # bf16 matmul operands (input + collapsed weight) with f32 accumulation
    assert err < 5e-2, f"mismatch vs reference: {err}"

    print("KERNEL_OK")
</pallas_src>

<mosaic_0001>
module attributes {stable_mosaic.version = 11 : i64} {
  func.func @_decoder_kernel(%arg0: i32, %arg1: i32, %arg2: memref<1x256x16xf32, #tpu.memory_space<vmem>>, %arg3: memref<128x256xbf16, #tpu.memory_space<vmem>>, %arg4: memref<128x1xf32, #tpu.memory_space<vmem>>, %arg5: memref<1x128x16xf32, #tpu.memory_space<vmem>>) attributes {dimension_semantics = [#tpu.dimension_semantics<parallel>, #tpu.dimension_semantics<parallel>], iteration_bounds = array<i64: 2, 1>, scalar_prefetch = 0 : i64, scratch_operands = 0 : i64, tpu.core_type = #tpu.core_type<tc>, window_params = [{transform_indices = @transform_0, window_bounds = array<i64: 1, 256, 16>}, {pipeline_mode = #tpu.pipeline_mode<synchronous>, transform_indices = @transform_1, window_bounds = array<i64: 128, 256>}, {pipeline_mode = #tpu.pipeline_mode<synchronous>, transform_indices = @transform_2, window_bounds = array<i64: 128, 1>}, {transform_indices = @transform_3, window_bounds = array<i64: 1, 128, 16>}]} {
    %c0 = arith.constant 0 : index
    %c0_0 = arith.constant 0 : index
    %c0_1 = arith.constant 0 : index
    %0 = vector.load %arg2[%c0, %c0_0, %c0_1] : memref<1x256x16xf32, #tpu.memory_space<vmem>>, vector<1x256x16xf32>
    %1 = vector.shape_cast %0 : vector<1x256x16xf32> to vector<256x16xf32>
    %2 = arith.truncf %1 : vector<256x16xf32> to vector<256x16xbf16>
    %c0_2 = arith.constant 0 : index
    %c0_3 = arith.constant 0 : index
    %3 = vector.load %arg3[%c0_2, %c0_3] : memref<128x256xbf16, #tpu.memory_space<vmem>>, vector<128x256xbf16>
    %cst = arith.constant dense<0.000000e+00> : vector<128x16xf32>
    %4 = tpu.matmul %3, %2, %cst {dimension_numbers = #tpu.dot_dimension_numbers<[1], [0], [0], [1], [0, 0, 1, 1], [], []>} : vector<128x256xbf16>, vector<256x16xbf16>, vector<128x16xf32> -> vector<128x16xf32>
    %c0_4 = arith.constant 0 : index
    %c0_5 = arith.constant 0 : index
    %5 = vector.load %arg4[%c0_4, %c0_5] : memref<128x1xf32, #tpu.memory_space<vmem>>, vector<128x1xf32>
    %6 = vector.broadcast %5 : vector<128x1xf32> to vector<128x16xf32>
    %7 = arith.addf %4, %6 : vector<128x16xf32>
    %c0_6 = arith.constant 0 : index
    %c0_7 = arith.constant 0 : index
    %c0_8 = arith.constant 0 : index
    %8 = vector.load %arg5[%c0_6, %c0_7, %c0_8] : memref<1x128x16xf32, #tpu.memory_space<vmem>>, vector<1x128x16xf32>
    %9 = vector.shape_cast %8 : vector<1x128x16xf32> to vector<128x16xf32>
    %10 = vector.shape_cast %7 : vector<128x16xf32> to vector<1x128x16xf32>
    tpu.vector_store %arg5[%c0_6, %c0_7, %c0_8], %10 {strides = array<i32>} : memref<1x128x16xf32, #tpu.memory_space<vmem>>, vector<1x128x16xf32>,
    return
  }
  func.func @transform_0(%arg0: i32, %arg1: i32) -> (i32, i32, i32) {
    %c0_i32 = arith.constant 0 : i32
    %c0_i32_0 = arith.constant 0 : i32
    return %arg0, %c0_i32, %arg1 : i32, i32, i32
  }
  func.func @transform_1(%arg0: i32, %arg1: i32) -> (i32, i32) {
    %c0_i32 = arith.constant 0 : i32
    %c0_i32_0 = arith.constant 0 : i32
    %c0_i32_1 = arith.constant 0 : i32
    return %c0_i32, %c0_i32_0 : i32, i32
  }
  func.func @transform_2(%arg0: i32, %arg1: i32) -> (i32, i32) {
    %c0_i32 = arith.constant 0 : i32
    %c0_i32_0 = arith.constant 0 : i32
    %c0_i32_1 = arith.constant 0 : i32
    return %c0_i32, %c0_i32_0 : i32, i32
  }
  func.func @transform_3(%arg0: i32, %arg1: i32) -> (i32, i32, i32) {
    %c0_i32 = arith.constant 0 : i32
    %c0_i32_0 = arith.constant 0 : i32
    return %arg0, %c0_i32, %arg1 : i32, i32, i32
  }
}

</mosaic_0001>

<llo_original>
// kernel: decoder_forward_packed.1
$region0: #{decoder_forward_packed.1}
  #allocation0 [shape = 'u32[]', space=smem, size = 0x4, offset = 0x4, fixed_abs, tag = 'smem constant byte address 0x4 - core index']
  #allocation1 [shape = 'u32[144,128]{1,0:T(1,128)}', space=vmem, size = 0x12000, scoped, tag = 'internal scratch']
  %s0 = inlined_call_operand.vmem [shape: f32[2,256,16], index: 0, kind: input, shape index: {}]
  %s1 = inlined_call_operand.vmem [shape: bf16[128,256], index: 1, kind: input, shape index: {}]
  %s2 = inlined_call_operand.vmem [shape: f32[128,1], index: 2, kind: input, shape index: {}]
  %s3 = inlined_call_operand.vmem [shape: f32[2,128,16], index: 3, kind: output, shape index: {}]
  %s4 = sld [smem:[#allocation0]]
  $region45: #{decoder_forward_packed.1} parent=0
    _
  %s6 = ssub.s32 1, %s4
  %s7 = scalar_select 0, %s6, %s4
  loop: start=0, step=1, limit=4
  $region2: #{decoder_forward_packed.1} parent=0 // loop_pre_header
    _
  $region3: #{decoder_forward_packed.1} parent=0 // loop_header
    %s9 = sphi 0, %s13
    %p10 = scmp.ge.s32.totalorder %s9, 4
    %s16 = sphi 0, %s28
    %s17 = sphi 0, %s24
    %s18 = sphi 0, %s16
    %s19 = sphi 0, %s17
    %s20 = sphi 0, %s18
    %s21 = sphi 0, %s19
    %s33 = sphi 0, %s35
    %s36 = sphi 0, %s33
    %s37 = sphi 0, %s36
    %s53 = sphi 0, %s37
    %s57 = sphi 0, %s57
    %s59 = sphi 0, %s57
    %s60 = sphi 0, %s59
    %s74 = sphi 0, %s60
    %s78 = sphi 0, %s78
    %s80 = sphi 0, %s78
    %s81 = sphi 0, %s80
    %s95 = sphi 0, %s81
    %s103 = sphi 0, %s105
    %s106 = sphi 0, %s103
    %s107 = sphi 0, %s106
    %s123 = sphi 0, %s107
  $region4: #{decoder_forward_packed.1} parent=0 // loop_header_branch
    %12 = sbr.rel (%p10) target = $region8
  $region5: #{decoder_forward_packed.1} parent=0 // loop_body
    %s14 = ssub.s32 %s9, 1
    %s15 = ssub.s32 %s9, 2
    %s22 = sadd.s32 1, %s17
    %p23 = scmp.ge.s32.totalorder %s22, 1
    %s24 = scalar_select %p23, 0, %s22
    %s25 = sadd.s32 1, %s16
    %s26 = scalar_select %p23, %s25, %s16
    %p27 = scmp.ge.s32.totalorder %s26, 2
    %s28 = scalar_select %p27, 0, %s26
    %s29 = ssub.s32 %s16, %s28
    %s30 = ssub.s32 %s17, %s24
    %s31 = sor.u32 %s29, %s30
    %p32 = scmp.eq.s32.totalorder %s31, 0
    %s34 = sadd.s32 %s33, 1
    %s35 = scalar_select %p32, %s33, %s34
    %p38 = pneg %p32
    %p39 = scmp.eq.s32.totalorder %s9, 1
    %p40 = por %p38, %p39
    %p41 = scmp.ne.s32.totalorder %s33, %s36
    %p42 = scmp.eq.s32.totalorder %s9, 0
    %p43 = por %p41, %p42
    %p44 = scmp.ne.s32.totalorder %s33, %s36
    %p45 = scmp.eq.s32.totalorder %s14, 1
    %p46 = por %p44, %p45
    %p47 = scmp.ne.s32.totalorder %s36, %s37
    %p48 = scmp.eq.s32.totalorder %s14, 0
    %p49 = por %p47, %p48
    %p50 = scmp.ne.s32.totalorder %s36, %s37
    %p51 = scmp.eq.s32.totalorder %s15, 1
    %p52 = por %p50, %p51
    %p54 = scmp.ne.s32.totalorder %s37, %s53
    %p55 = scmp.eq.s32.totalorder %s15, 0
    %p56 = por %p54, %p55
    %s58 = sadd.s32 %s57, 1
    %p61 = scmp.eq.s32.totalorder %s9, 1
    %p62 = scmp.ne.s32.totalorder %s57, %s59
    %p63 = scmp.eq.s32.totalorder %s9, 0
    %p64 = por %p62, %p63
    %p65 = scmp.ne.s32.totalorder %s57, %s59
    %p66 = scmp.eq.s32.totalorder %s14, 1
    %p67 = por %p65, %p66
    %p68 = scmp.ne.s32.totalorder %s59, %s60
    %p69 = scmp.eq.s32.totalorder %s14, 0
    %p70 = por %p68, %p69
    %p71 = scmp.ne.s32.totalorder %s59, %s60
    %p72 = scmp.eq.s32.totalorder %s15, 1
    %p73 = por %p71, %p72
    %p75 = scmp.ne.s32.totalorder %s60, %s74
    %p76 = scmp.eq.s32.totalorder %s15, 0
    %p77 = por %p75, %p76
    %s79 = sadd.s32 %s78, 1
    %p82 = scmp.eq.s32.totalorder %s9, 1
    %p83 = scmp.ne.s32.totalorder %s78, %s80
    %p84 = scmp.eq.s32.totalorder %s9, 0
    %p85 = por %p83, %p84
    %p86 = scmp.ne.s32.totalorder %s78, %s80
    %p87 = scmp.eq.s32.totalorder %s14, 1
    %p88 = por %p86, %p87
    %p89 = scmp.ne.s32.totalorder %s80, %s81
    %p90 = scmp.eq.s32.totalorder %s14, 0
    %p91 = por %p89, %p90
    %p92 = scmp.ne.s32.totalorder %s80, %s81
    %p93 = scmp.eq.s32.totalorder %s15, 1
    %p94 = por %p92, %p93
    %p96 = scmp.ne.s32.totalorder %s81, %s95
    %p97 = scmp.eq.s32.totalorder %s15, 0
    %p98 = por %p96, %p97
    %s99 = ssub.s32 %s16, %s28
    %s100 = ssub.s32 %s17, %s24
    %s101 = sor.u32 %s99, %s100
    %p102 = scmp.eq.s32.totalorder %s101, 0
    %s104 = sadd.s32 %s103, 1
    %s105 = scalar_select %p102, %s103, %s104
    %p108 = pneg %p102
    %p109 = scmp.eq.s32.totalorder %s9, 1
    %p110 = por %p108, %p109
    %p111 = scmp.ne.s32.totalorder %s103, %s106
    %p112 = scmp.eq.s32.totalorder %s9, 0
    %p113 = por %p111, %p112
    %p114 = scmp.ne.s32.totalorder %s103, %s106
    %p115 = scmp.eq.s32.totalorder %s14, 1
    %p116 = por %p114, %p115
    %p117 = scmp.ne.s32.totalorder %s106, %s107
    %p118 = scmp.eq.s32.totalorder %s14, 0
    %p119 = por %p117, %p118
    %p120 = scmp.ne.s32.totalorder %s106, %s107
    %p121 = scmp.eq.s32.totalorder %s15, 1
    %p122 = por %p120, %p121
    %p124 = scmp.ne.s32.totalorder %s107, %s123
    %p125 = scmp.eq.s32.totalorder %s15, 0
    %p126 = por %p124, %p125
    %p127 = scmp.le.s32.totalorder 1, %s9
    %p128 = scmp.lt.s32.totalorder %s9, 3
    %p129 = pnand %p127, %p128
    %p130 = pneg %p129
    // Predicated region
    $region9: #{decoder_forward_packed.1} parent=5 // pred_check
      _
    $region10: #{decoder_forward_packed.1} parent=5 // pred_check_branch
      %132 = sbr.rel (%p129) target = $region12
    $region11: #{decoder_forward_packed.1} parent=5 // pred_region
      %s133 = ssub.s32 %s9, 1
      // Predicated region
      $region13: #{decoder_forward_packed.1} parent=11 // pred_check
        %p134 = pneg %p70
      $region14: #{decoder_forward_packed.1} parent=11 // pred_check_branch
        %136 = sbr.rel (%p134) target = $region16
      $region15: #{decoder_forward_packed.1} parent=11 // pred_region
        _
      $region16: #{decoder_forward_packed.1} parent=11 // pred_fallthru
        _
      // Predicated region
      $region17: #{decoder_forward_packed.1} parent=11 // pred_check
        %p137 = pneg %p91
      $region18: #{decoder_forward_packed.1} parent=11 // pred_check_branch
        %139 = sbr.rel (%p137) target = $region20
      $region19: #{decoder_forward_packed.1} parent=11 // pred_region
        _
      $region20: #{decoder_forward_packed.1} parent=11 // pred_fallthru
        _
    $region12: #{decoder_forward_packed.1} parent=5 // pred_fallthru
      _
    %p140 = scmp.lt.s32.totalorder %s9, 2
    // Predicated region
    $region21: #{decoder_forward_packed.1} parent=5 // pred_check
      %p141 = pneg %p140
    $region22: #{decoder_forward_packed.1} parent=5 // pred_check_branch
      %143 = sbr.rel (%p141) target = $region24
    $region23: #{decoder_forward_packed.1} parent=5 // pred_region
      // Predicated region
      $region25: #{decoder_forward_packed.1} parent=23 // pred_check
        %p144 = pneg %p43
      $region26: #{decoder_forward_packed.1} parent=23 // pred_check_branch
        %146 = sbr.rel (%p144) target = $region28
      $region27: #{decoder_forward_packed.1} parent=23 // pred_region
        %p147 = scmp.lt.s32.totalorder %s16, 1
        %s148 = scalar_select %p147, %s16, 1
        %p149 = scmp.lt.s32.totalorder %s17, 0
        %s150 = scalar_select %p149, %s17, 0
        %s151 = smul.addr %s148, 32
        %s152 = sadd.s32 %s150, %s151
        %s153 = smul.addr %s152, 8
        %s154 = scalar_lea.vmem %s0, %s153
      $region28: #{decoder_forward_packed.1} parent=23 // pred_fallthru
        _
    $region24: #{decoder_forward_packed.1} parent=5 // pred_fallthru
      _
    %p155 = scmp.le.s32.totalorder 1, %s9
    %p156 = scmp.lt.s32.totalorder %s9, 3
    %p157 = pnand %p155, %p156
    %p158 = pneg %p157
    // Predicated region
    $region29: #{decoder_forward_packed.1} parent=5 // pred_check
      _
    $region30: #{decoder_forward_packed.1} parent=5 // pred_check_branch
      %160 = sbr.rel (%p157) target = $region32
    $region31: #{decoder_forward_packed.1} parent=5 // pred_region
      %s161 = ssub.s32 %s9, 1
      %p162 = scmp.lt.s32.totalorder %s18, 1
      %s163 = scalar_select %p162, %s18, 1
      %p164 = scmp.lt.s32.totalorder %s19, 0
      %s165 = scalar_select %p164, %s19, 0
      %s166 = smul.addr %s163, 32
      %s167 = sadd.s32 %s165, %s166
      %s168 = smul.addr %s167, 8
      %s169 = scalar_lea.vmem %s0, %s168
      %p170 = pneg %p49
      %p171 = pneg %p46
      %p172 = pneg %p70
      %p173 = pneg %p67
      %p174 = pneg %p91
      %p175 = pneg %p88
      %p176 = pneg %p119
      %p177 = pneg %p116
      %p178 = scmp.lt.s32.totalorder %s18, 1
      %s179 = scalar_select %p178, %s18, 1
      %p180 = scmp.lt.s32.totalorder %s19, 0
      %s181 = scalar_select %p180, %s19, 0
      %s182 = smul.addr %s179, 16
      %s183 = sadd.s32 %s181, %s182
      %s184 = smul.addr %s183, 8
      %s185 = scalar_lea.vmem %s3, %s184
      %p186 = scmp.lt.s32.totalorder %s18, 1
      %s187 = scalar_select %p186, %s18, 1
      %p188 = scmp.lt.s32.totalorder %s19, 0
      %s189 = scalar_select %p188, %s19, 0
      %s190 = smul.addr %s187, 32
      %s191 = sadd.s32 %s189, %s190
      %s192 = smul.addr %s191, 8
      %s193 = scalar_lea.vmem %s0, %s192
      %p194 = scmp.lt.s32.totalorder %s18, 1
      %s195 = scalar_select %p194, %s18, 1
      %p196 = scmp.lt.s32.totalorder %s19, 0
      %s197 = scalar_select %p196, %s19, 0
      %s198 = smul.addr %s195, 16
      %s199 = sadd.s32 %s197, %s198
      %s200 = smul.addr %s199, 8
      %s201 = scalar_lea.vmem %s3, %s200
      %v203 = vld [vmem:[%s193] sm:$0xff]
      %v204 = vld [vmem:[%s193 + $0x8] sm:$0xff]
      %v205 = vld [vmem:[%s193 + $0x10] sm:$0xff]
      %v206 = vld [vmem:[%s193 + $0x18] sm:$0xff]
      %v207 = vld [vmem:[%s193 + $0x20] sm:$0xff]
      %v208 = vld [vmem:[%s193 + $0x28] sm:$0xff]
      %v209 = vld [vmem:[%s193 + $0x30] sm:$0xff]
      %v210 = vld [vmem:[%s193 + $0x38] sm:$0xff]
      %v211 = vld [vmem:[%s193 + $0x40] sm:$0xff]
      %v212 = vld [vmem:[%s193 + $0x48] sm:$0xff]
      %v213 = vld [vmem:[%s193 + $0x50] sm:$0xff]
      %v214 = vld [vmem:[%s193 + $0x58] sm:$0xff]
      %v215 = vld [vmem:[%s193 + $0x60] sm:$0xff]
      %v216 = vld [vmem:[%s193 + $0x68] sm:$0xff]
      %v217 = vld [vmem:[%s193 + $0x70] sm:$0xff]
      %v218 = vld [vmem:[%s193 + $0x78] sm:$0xff]
      %v219 = vld [vmem:[%s193 + $0x80] sm:$0xff]
      %v220 = vld [vmem:[%s193 + $0x88] sm:$0xff]
      %v221 = vld [vmem:[%s193 + $0x90] sm:$0xff]
      %v222 = vld [vmem:[%s193 + $0x98] sm:$0xff]
      %v223 = vld [vmem:[%s193 + $0xa0] sm:$0xff]
      %v224 = vld [vmem:[%s193 + $0xa8] sm:$0xff]
      %v225 = vld [vmem:[%s193 + $0xb0] sm:$0xff]
      %v226 = vld [vmem:[%s193 + $0xb8] sm:$0xff]
      %v227 = vld [vmem:[%s193 + $0xc0] sm:$0xff]
      %v228 = vld [vmem:[%s193 + $0xc8] sm:$0xff]
      %v229 = vld [vmem:[%s193 + $0xd0] sm:$0xff]
      %v230 = vld [vmem:[%s193 + $0xd8] sm:$0xff]
      %v231 = vld [vmem:[%s193 + $0xe0] sm:$0xff]
      %v232 = vld [vmem:[%s193 + $0xe8] sm:$0xff]
      %v233 = vld [vmem:[%s193 + $0xf0] sm:$0xff]
      %v234 = vld [vmem:[%s193 + $0xf8] sm:$0xff]
      %v235 = vpack.c.bf16 %v204, %v203
      %v236 = vpack.c.bf16 %v206, %v205
      %v237 = vpack.c.bf16 %v208, %v207
      %v238 = vpack.c.bf16 %v210, %v209
      %v239 = vpack.c.bf16 %v212, %v211
      %v240 = vpack.c.bf16 %v214, %v213
      %v241 = vpack.c.bf16 %v216, %v215
      %v242 = vpack.c.bf16 %v218, %v217
      %v243 = vpack.c.bf16 %v220, %v219
      %v244 = vpack.c.bf16 %v222, %v221
      %v245 = vpack.c.bf16 %v224, %v223
      %v246 = vpack.c.bf16 %v226, %v225
      %v247 = vpack.c.bf16 %v228, %v227
      %v248 = vpack.c.bf16 %v230, %v229
      %v249 = vpack.c.bf16 %v232, %v231
      %v250 = vpack.c.bf16 %v234, %v233
      %v251 = vld [vmem:[%s1] sm:$0xff]
      %v252 = vld [vmem:[%s1 + $0x8] sm:$0xff]
      %v253 = vld [vmem:[%s1 + $0x10] sm:$0xff]
      %v254 = vld [vmem:[%s1 + $0x18] sm:$0xff]
      %v255 = vld [vmem:[%s1 + $0x20] sm:$0xff]
      %v256 = vld [vmem:[%s1 + $0x28] sm:$0xff]
      %v257 = vld [vmem:[%s1 + $0x30] sm:$0xff]
      %v258 = vld [vmem:[%s1 + $0x38] sm:$0xff]
      %v259 = vld [vmem:[%s1 + $0x40] sm:$0xff]
      %v260 = vld [vmem:[%s1 + $0x48] sm:$0xff]
      %v261 = vld [vmem:[%s1 + $0x50] sm:$0xff]
      %v262 = vld [vmem:[%s1 + $0x58] sm:$0xff]
      %v263 = vld [vmem:[%s1 + $0x60] sm:$0xff]
      %v264 = vld [vmem:[%s1 + $0x68] sm:$0xff]
      %v265 = vld [vmem:[%s1 + $0x70] sm:$0xff]
      %v266 = vld [vmem:[%s1 + $0x78] sm:$0xff]
      %v267 = vld [vmem:[%s2] sm:$0xff]
      %v268 = vld [vmem:[%s2 + $0x8] sm:$0xff]
      %v269 = vld [vmem:[%s2 + $0x10] sm:$0xff]
      %v270 = vld [vmem:[%s2 + $0x18] sm:$0xff]
      %v271 = vld [vmem:[%s2 + $0x20] sm:$0xff]
      %v272 = vld [vmem:[%s2 + $0x28] sm:$0xff]
      %v273 = vld [vmem:[%s2 + $0x30] sm:$0xff]
      %v274 = vld [vmem:[%s2 + $0x38] sm:$0xff]
      %v275 = vld [vmem:[%s2 + $0x40] sm:$0xff]
      %v276 = vld [vmem:[%s2 + $0x48] sm:$0xff]
      %v277 = vld [vmem:[%s2 + $0x50] sm:$0xff]
      %v278 = vld [vmem:[%s2 + $0x58] sm:$0xff]
      %v279 = vld [vmem:[%s2 + $0x60] sm:$0xff]
      %v280 = vld [vmem:[%s2 + $0x68] sm:$0xff]
      %v281 = vld [vmem:[%s2 + $0x70] sm:$0xff]
      %v282 = vld [vmem:[%s2 + $0x78] sm:$0xff]
      %284 = vset.pattern.permute.xlu0 0
      %285 = vperm.xlu0 %284, %v267
      %v286 = vpop.permute.xlu0 %285
      %289 = vset.pattern.permute.xlu0 0
      %290 = vperm.xlu0 %289, %v268
      %v291 = vpop.permute.xlu0 %290
      %294 = vset.pattern.permute.xlu0 0
      %295 = vperm.xlu0 %294, %v269
      %v296 = vpop.permute.xlu0 %295
      %299 = vset.pattern.permute.xlu0 0
      %300 = vperm.xlu0 %299, %v270
      %v301 = vpop.permute.xlu0 %300
      %304 = vset.pattern.permute.xlu0 0
      %305 = vperm.xlu0 %304, %v271
      %v306 = vpop.permute.xlu0 %305
      %309 = vset.pattern.permute.xlu0 0
      %310 = vperm.xlu0 %309, %v272
      %v311 = vpop.permute.xlu0 %310
      %314 = vset.pattern.permute.xlu0 0
      %315 = vperm.xlu0 %314, %v273
      %v316 = vpop.permute.xlu0 %315
      %319 = vset.pattern.permute.xlu0 0
      %320 = vperm.xlu0 %319, %v274
      %v321 = vpop.permute.xlu0 %320
      %324 = vset.pattern.permute.xlu0 0
      %325 = vperm.xlu0 %324, %v275
      %v326 = vpop.permute.xlu0 %325
      %329 = vset.pattern.permute.xlu0 0
      %330 = vperm.xlu0 %329, %v276
      %v331 = vpop.permute.xlu0 %330
      %334 = vset.pattern.permute.xlu0 0
      %335 = vperm.xlu0 %334, %v277
      %v336 = vpop.permute.xlu0 %335
      %339 = vset.pattern.permute.xlu0 0
      %340 = vperm.xlu0 %339, %v278
      %v341 = vpop.permute.xlu0 %340
      %344 = vset.pattern.permute.xlu0 0
      %345 = vperm.xlu0 %344, %v279
      %v346 = vpop.permute.xlu0 %345
      %349 = vset.pattern.permute.xlu0 0
      %350 = vperm.xlu0 %349, %v280
      %v351 = vpop.permute.xlu0 %350
      %354 = vset.pattern.permute.xlu0 0
      %355 = vperm.xlu0 %354, %v281
      %v356 = vpop.permute.xlu0 %355
      %359 = vset.pattern.permute.xlu0 0
      %360 = vperm.xlu0 %359, %v282
      %v361 = vpop.permute.xlu0 %360
      %v379 = vunpack.c.l.b16 %v251
      %v380 = vunpack.c.h.b16 %v251
      %v381 = vunpack.c.l.b16 %v252
      %v382 = vunpack.c.h.b16 %v252
      %v383 = vunpack.c.l.b16 %v253
      %v384 = vunpack.c.h.b16 %v253
      %v385 = vunpack.c.l.b16 %v254
      %v386 = vunpack.c.h.b16 %v254
      %v387 = vunpack.c.l.b16 %v255
      %v388 = vunpack.c.h.b16 %v255
      %v389 = vunpack.c.l.b16 %v256
      %v390 = vunpack.c.h.b16 %v256
      %v391 = vunpack.c.l.b16 %v257
      %v392 = vunpack.c.h.b16 %v257
      %v393 = vunpack.c.l.b16 %v258
      %v394 = vunpack.c.h.b16 %v258
      %v395 = vunpack.c.l.b16 %v259
      %v396 = vunpack.c.h.b16 %v259
      %v397 = vunpack.c.l.b16 %v260
      %v398 = vunpack.c.h.b16 %v260
      %v399 = vunpack.c.l.b16 %v261
      %v400 = vunpack.c.h.b16 %v261
      %v401 = vunpack.c.l.b16 %v262
      %v402 = vunpack.c.h.b16 %v262
      %v403 = vunpack.c.l.b16 %v263
      %v404 = vunpack.c.h.b16 %v263
      %v405 = vunpack.c.l.b16 %v264
      %v406 = vunpack.c.h.b16 %v264
      %v407 = vunpack.c.l.b16 %v265
      %v408 = vunpack.c.h.b16 %v265
      %v409 = vunpack.c.l.b16 %v266
      %v410 = vunpack.c.h.b16 %v266
      %v411 = vpack.c.b16 %v381, %v379
      %v412 = vpack.c.b16 %v382, %v380
      %v413 = vpack.c.b16 %v385, %v383
      %v414 = vpack.c.b16 %v386, %v384
      %v415 = vpack.c.b16 %v389, %v387
      %v416 = vpack.c.b16 %v390, %v388
      %v417 = vpack.c.b16 %v393, %v391
      %v418 = vpack.c.b16 %v394, %v392
      %v419 = vpack.c.b16 %v397, %v395
      %v420 = vpack.c.b16 %v398, %v396
      %v421 = vpack.c.b16 %v401, %v399
      %v422 = vpack.c.b16 %v402, %v400
      %v423 = vpack.c.b16 %v405, %v403
      %v424 = vpack.c.b16 %v406, %v404
      %v425 = vpack.c.b16 %v409, %v407
      %v426 = vpack.c.b16 %v410, %v408
      %443 = vmatprep.subr.bf16.mxu0 0
      %444 = vmatpush1.bf16.msra.mxu0 %v235
      %445 = vmatprep.subr.bf16.mxu0 0
      %446 = vmatpush1.bf16.msra.mxu0 %v236
      %447 = vmatprep.subr.bf16.mxu0 0
      %448 = vmatpush1.bf16.msra.mxu0 %v237
      %449 = vmatprep.subr.bf16.mxu0 0
      %450 = vmatpush1.bf16.msra.mxu0 %v238
      %451 = vmatprep.subr.bf16.mxu0 0
      %452 = vmatpush1.bf16.msra.mxu0 %v239
      %453 = vmatprep.subr.bf16.mxu0 0
      %454 = vmatpush1.bf16.msra.mxu0 %v240
      %455 = vmatprep.subr.bf16.mxu0 0
      %456 = vmatpush1.bf16.msra.mxu0 %v241
      %457 = vmatprep.subr.bf16.mxu0 0
      %458 = vmatpush1.bf16.msra.mxu0 %v242
      %459 = vmatprep.subr.bf16.mxu0 0
      %460 = vmatpush1.bf16.msra.mxu0 %v243
      %461 = vmatprep.subr.bf16.mxu0 0
      %462 = vmatpush1.bf16.msra.mxu0 %v244
      %463 = vmatprep.subr.bf16.mxu0 0
      %464 = vmatpush1.bf16.msra.mxu0 %v245
      %465 = vmatprep.subr.bf16.mxu0 0
      %466 = vmatpush1.bf16.msra.mxu0 %v246
      %467 = vmatprep.subr.bf16.mxu0 0
      %468 = vmatpush1.bf16.msra.mxu0 %v247
      %469 = vmatprep.subr.bf16.mxu0 0
      %470 = vmatpush1.bf16.msra.mxu0 %v248
      %471 = vmatprep.subr.bf16.mxu0 0
      %472 = vmatpush1.bf16.msra.mxu0 %v249
      %473 = vmatprep.subr.bf16.mxu0 0
      %474 = vmatpush1.bf16.msra.mxu0 %v250
      %475 = vmatprep.mubr.bf16.mxu0 %v412
      %476 = vmatmul.mubr.bf16.gmra.mrb[0].mxu0 %v411
      %v477 = vpop.f32.mrb[0].mxu0
      %v478 = vadd.f32 %v286, %v477
      %v479 = vpop.f32.mrb[0].mxu0
      %v480 = vpop.f32.mrb[0].mxu0
      %v481 = vadd.f32 %v291, %v480
      %v482 = vpop.f32.mrb[0].mxu0
      %483 = vmatprep.mubr.bf16.mxu0 %v414
      %484 = vmatmul.mubr.bf16.gmra.mrb[0].mxu0 %v413
      %v485 = vpop.f32.mrb[0].mxu0
      %v486 = vadd.f32 %v296, %v485
      %v487 = vpop.f32.mrb[0].mxu0
      %v488 = vpop.f32.mrb[0].mxu0
      %v489 = vadd.f32 %v301, %v488
      %v490 = vpop.f32.mrb[0].mxu0
      %491 = vmatprep.mubr.bf16.mxu0 %v416
      %492 = vmatmul.mubr.bf16.gmra.mrb[0].mxu0 %v415
      %v493 = vpop.f32.mrb[0].mxu0
      %v494 = vadd.f32 %v306, %v493
      %v495 = vpop.f32.mrb[0].mxu0
      %v496 = vpop.f32.mrb[0].mxu0
      %v497 = vadd.f32 %v311, %v496
      %v498 = vpop.f32.mrb[0].mxu0
      %499 = vmatprep.mubr.bf16.mxu0 %v418
      %500 = vmatmul.mubr.bf16.gmra.mrb[0].mxu0 %v417
      %v501 = vpop.f32.mrb[0].mxu0
      %v502 = vadd.f32 %v316, %v501
      %v503 = vpop.f32.mrb[0].mxu0
      %v504 = vpop.f32.mrb[0].mxu0
      %v505 = vadd.f32 %v321, %v504
      %v506 = vpop.f32.mrb[0].mxu0
      %507 = vmatprep.mubr.bf16.mxu0 %v420
      %508 = vmatmul.mubr.bf16.gmra.mrb[0].mxu0 %v419
      %v509 = vpop.f32.mrb[0].mxu0
      %v510 = vadd.f32 %v326, %v509
      %v511 = vpop.f32.mrb[0].mxu0
      %v512 = vpop.f32.mrb[0].mxu0
      %v513 = vadd.f32 %v331, %v512
      %v514 = vpop.f32.mrb[0].mxu0
      %515 = vmatprep.mubr.bf16.mxu0 %v422
      %516 = vmatmul.mubr.bf16.gmra.mrb[0].mxu0 %v421
      %v517 = vpop.f32.mrb[0].mxu0
      %v518 = vadd.f32 %v336, %v517
      %v519 = vpop.f32.mrb[0].mxu0
      %v520 = vpop.f32.mrb[0].mxu0
      %v521 = vadd.f32 %v341, %v520
      %v522 = vpop.f32.mrb[0].mxu0
      %523 = vmatprep.mubr.bf16.mxu0 %v424
      %524 = vmatmul.mubr.bf16.gmra.mrb[0].mxu0 %v423
      %v525 = vpop.f32.mrb[0].mxu0
      %v526 = vadd.f32 %v346, %v525
      %v527 = vpop.f32.mrb[0].mxu0
      %v528 = vpop.f32.mrb[0].mxu0
      %v529 = vadd.f32 %v351, %v528
      %v530 = vpop.f32.mrb[0].mxu0
      %531 = vmatprep.mubr.bf16.mxu0 %v426
      %532 = vmatmul.mubr.bf16.gmra.mrb[0].mxu0 %v425
      %v533 = vpop.f32.mrb[0].mxu0
      %v534 = vadd.f32 %v356, %v533
      %v535 = vpop.f32.mrb[0].mxu0
      %v536 = vpop.f32.mrb[0].mxu0
      %v537 = vadd.f32 %v361, %v536
      %v538 = vpop.f32.mrb[0].mxu0
      %539 = vdwg.mxu0
      %vm540 = vcmask 130048
      %541 = vst.msk [vmem:[%s201] sm:$0xff] %vm540, %v478
      %542 = vst.msk [vmem:[%s201 + $0x8] sm:$0xff] %vm540, %v481
      %543 = vst.msk [vmem:[%s201 + $0x10] sm:$0xff] %vm540, %v486
      %544 = vst.msk [vmem:[%s201 + $0x18] sm:$0xff] %vm540, %v489
      %545 = vst.msk [vmem:[%s201 + $0x20] sm:$0xff] %vm540, %v494
      %546 = vst.msk [vmem:[%s201 + $0x28] sm:$0xff] %vm540, %v497
      %547 = vst.msk [vmem:[%s201 + $0x30] sm:$0xff] %vm540, %v502
      %548 = vst.msk [vmem:[%s201 + $0x38] sm:$0xff] %vm540, %v505
      %549 = vst.msk [vmem:[%s201 + $0x40] sm:$0xff] %vm540, %v510
      %550 = vst.msk [vmem:[%s201 + $0x48] sm:$0xff] %vm540, %v513
      %551 = vst.msk [vmem:[%s201 + $0x50] sm:$0xff] %vm540, %v518
      %552 = vst.msk [vmem:[%s201 + $0x58] sm:$0xff] %vm540, %v521
      %553 = vst.msk [vmem:[%s201 + $0x60] sm:$0xff] %vm540, %v526
      %554 = vst.msk [vmem:[%s201 + $0x68] sm:$0xff] %vm540, %v529
      %555 = vst.msk [vmem:[%s201 + $0x70] sm:$0xff] %vm540, %v534
      %556 = vst.msk [vmem:[%s201 + $0x78] sm:$0xff] %vm540, %v537
      %p557 = scmp.lt.s32.totalorder %s18, 1
      %s558 = scalar_select %p557, %s18, 1
      %p559 = scmp.lt.s32.totalorder %s19, 0
      %s560 = scalar_select %p559, %s19, 0
      %s561 = smul.addr %s558, 16
      %s562 = sadd.s32 %s560, %s561
      %s563 = smul.addr %s562, 8
      %s564 = scalar_lea.vmem %s3, %s563
      // Predicated region
      $region33: #{decoder_forward_packed.1} parent=31 // pred_check
        %p565 = pneg %p116
      $region34: #{decoder_forward_packed.1} parent=31 // pred_check_branch
        %567 = sbr.rel (%p565) target = $region36
      $region35: #{decoder_forward_packed.1} parent=31 // pred_region
        _
      $region36: #{decoder_forward_packed.1} parent=31 // pred_fallthru
        _
    $region32: #{decoder_forward_packed.1} parent=5 // pred_fallthru
      _
    %p568 = scmp.le.s32.totalorder 2, %s9
    // Predicated region
    $region37: #{decoder_forward_packed.1} parent=5 // pred_check
      %p569 = pneg %p568
    $region38: #{decoder_forward_packed.1} parent=5 // pred_check_branch
      %571 = sbr.rel (%p569) target = $region40
    $region39: #{decoder_forward_packed.1} parent=5 // pred_region
      %s572 = ssub.s32 %s9, 2
      // Predicated region
      $region41: #{decoder_forward_packed.1} parent=39 // pred_check
        %p573 = pneg %p122
      $region42: #{decoder_forward_packed.1} parent=39 // pred_check_branch
        %575 = sbr.rel (%p573) target = $region44
      $region43: #{decoder_forward_packed.1} parent=39 // pred_region
        %p576 = scmp.lt.s32.totalorder %s20, 1
        %s577 = scalar_select %p576, %s20, 1
        %p578 = scmp.lt.s32.totalorder %s21, 0
        %s579 = scalar_select %p578, %s21, 0
        %s580 = smul.addr %s577, 16
        %s581 = sadd.s32 %s579, %s580
        %s582 = smul.addr %s581, 8
        %s583 = scalar_lea.vmem %s3, %s582
      $region44: #{decoder_forward_packed.1} parent=39 // pred_fallthru
        _
    $region40: #{decoder_forward_packed.1} parent=5 // pred_fallthru
      _
  $region6: #{decoder_forward_packed.1} parent=0 // loop_footer
    %s13 = sadd.s32 1, %s9
  $region7: #{decoder_forward_packed.1} parent=0 // loop_footer_branch
    %8 = sbr.rel target = $region3
  $region8: #{decoder_forward_packed.1} parent=0 // loop_exit
    _

</llo_original>
